<compile_context>
chip_gen: v6e
topology: v6e:2x2x1
jax: 0.10.0
libtpu: 0.0.40
codegen_flags: <defaults>
</compile_context>

<pallas_src>
import functools
import math

import jax
import jax.numpy as jnp
from jax import lax
from jax.experimental import pallas as pl
from jax.experimental.pallas import tpu as pltpu


def lambda_init_fn(depth):
    return 0.8 - 0.6 * math.exp(-0.3 * depth)


def _tile(dim, target):
    """Largest divisor of `dim` that is <= target (>= 1)."""
    t = max(1, min(dim, target))
    while dim % t:
        t -= 1
    return t


def _nan_to_num(x):
    """torch.nan_to_num semantics: NaN -> 0, +/-inf -> finfo max/min."""
    info = jnp.finfo(x.dtype)
    x = jnp.where(jnp.isnan(x), jnp.zeros_like(x), x)
    return jnp.clip(x, info.min, info.max)


# ---------------------------------------------------------------------------
# Tiled linear kernel: y = x @ w.T   (torch nn.Linear weight layout, no bias)
# ---------------------------------------------------------------------------
def _linear_kernel(x_ref, w_ref, o_ref, acc_ref):
    @pl.when(pl.program_id(2) == 0)
    def _():
        acc_ref[...] = jnp.zeros(acc_ref.shape, acc_ref.dtype)

    # Contract x's K with w's K directly (trans-B absorbed into the MXU feed;
    # no wrapper-side weight transpose).
    acc_ref[...] += lax.dot_general(
        x_ref[...], w_ref[...],
        dimension_numbers=(((1,), (1,)), ((), ())),
        preferred_element_type=jnp.float32)

    @pl.when(pl.program_id(2) == pl.num_programs(2) - 1)
    def _():
        o_ref[...] = acc_ref[...].astype(o_ref.dtype)


def pallas_linear(x, w, out_dtype=jnp.float32, *, tm=256, tn=256, tk=512):
    """x: (M, K), w: (N, K) [torch Linear layout] -> (M, N) in out_dtype."""
    M, K = x.shape
    N, K2 = w.shape
    assert K == K2
    tm, tn, tk = _tile(M, tm), _tile(N, tn), _tile(K, tk)
    grid = (M // tm, N // tn, K // tk)
    cost = pl.CostEstimate(
        flops=int(2 * M * N * K),
        transcendentals=0,
        bytes_accessed=int(M * K * x.dtype.itemsize
                           + N * K * w.dtype.itemsize
                           + M * N * jnp.dtype(out_dtype).itemsize))
    return pl.pallas_call(
        _linear_kernel,
        out_shape=jax.ShapeDtypeStruct((M, N), out_dtype),
        grid=grid,
        in_specs=[
            pl.BlockSpec((tm, tk), lambda i, j, k: (i, k)),
            pl.BlockSpec((tn, tk), lambda i, j, k: (j, k)),
        ],
        out_specs=pl.BlockSpec((tm, tn), lambda i, j, k: (i, j)),
        scratch_shapes=[pltpu.VMEM((tm, tn), jnp.float32)],
        compiler_params=pltpu.CompilerParams(
            dimension_semantics=("parallel", "parallel", "arbitrary"),
            vmem_limit_bytes=32 * 1024 * 1024),
        cost_estimate=cost,
    )(x, w)


# ---------------------------------------------------------------------------
# Pass 1: flash-style differential attention (context output + softmax stats)
# ---------------------------------------------------------------------------
def _diff_flash_kernel(lam_ref, gw_ref, q_ref, k_ref, v_ref,
                       o_ref, m_out_ref, l_out_ref,
                       m_scr, l_scr, acc_scr,
                       *, scaling, lambda_init, eps):
    # q_ref: (hb, 2, Tt, Hd) bf16   k_ref: (hb, 2, St, Hd) bf16
    # v_ref: (hb, St, Hd) bf16      o_ref: (hb, Tt, Hd) f32
    # m_out/l_out: (hb, 2, Tt, 1) f32
    # m_scr / l_scr: (2*hb, Tt, 1) f32, acc_scr: (2*hb, Tt, Hd) f32
    hb, _, q_tile, head_dim = q_ref.shape
    kv_tile = k_ref.shape[2]
    ki = pl.program_id(3)

    @pl.when(ki == 0)
    def _():
        m_scr[...] = jnp.full(m_scr.shape, -jnp.inf, m_scr.dtype)
        l_scr[...] = jnp.zeros(l_scr.shape, l_scr.dtype)
        acc_scr[...] = jnp.zeros(acc_scr.shape, acc_scr.dtype)

    # Fold (head, component) -> one batch axis: row r = 2*h + c.
    q = q_ref[...].reshape(2 * hb, q_tile, head_dim)
    k = k_ref[...].reshape(2 * hb, kv_tile, head_dim)

    s = jnp.einsum("bqd,bkd->bqk", q, k,
                   preferred_element_type=jnp.float32) * scaling
    # Mirrors torch.nan_to_num(attn_weights) in the reference module.
    s = _nan_to_num(s)

    m_prev = m_scr[...]
    m_new = jnp.maximum(m_prev, jnp.max(s, axis=-1, keepdims=True))
    alpha = jnp.exp(m_prev - m_new)
    p = jnp.exp(s - m_new)                                   # (2hb, Tt, St)
    l_scr[...] = alpha * l_scr[...] + jnp.sum(p, axis=-1, keepdims=True)
    m_scr[...] = m_new

    # Both differential components of a head attend over the same V block.
    # Fold the component axis into query rows so V is fed to the MXU once:
    #   p: (hb, 2*Tt, St) @ v: (hb, St, Hd) -> (hb, 2*Tt, Hd)
    v = v_ref[...]                                           # (hb, St, Hd)
    p2 = p.reshape(hb, 2 * q_tile, kv_tile).astype(v.dtype)
    pv = jnp.einsum("hqk,hkd->hqd", p2, v,
                    preferred_element_type=jnp.float32)
    acc_scr[...] = alpha * acc_scr[...] + pv.reshape(2 * hb, q_tile, head_dim)

    @pl.when(ki == pl.num_programs(3) - 1)
    def _():
        lam = lam_ref[0]
        inv_l = pl.reciprocal(l_scr[...], approx=True)       # (2hb, Tt, 1)
        ctx = (acc_scr[...] * inv_l).reshape(hb, 2, q_tile, head_dim)
        ctx = ctx[:, 0] - lam * ctx[:, 1]                    # (hb, Tt, Hd)
        # RMSNorm over head_dim (eps=1e-5, elementwise affine), then scale.
        ms = jnp.mean(ctx * ctx, axis=-1, keepdims=True)
        ctx = ctx * lax.rsqrt(ms + eps)
        ctx = ctx * gw_ref[...].reshape(1, 1, head_dim)
        ctx = ctx * (1.0 - lambda_init)
        o_ref[...] = ctx.astype(o_ref.dtype)
        m_out_ref[...] = m_scr[...].reshape(hb, 2, q_tile, 1)
        l_out_ref[...] = l_scr[...].reshape(hb, 2, q_tile, 1)


# ---------------------------------------------------------------------------
# Pass 2: exact normalized differential attention weights (module output)
# ---------------------------------------------------------------------------
def _diff_weights_kernel(lam_ref, q_ref, k_ref, m_ref, l_ref, aw_ref,
                         *, scaling):
    hb, _, q_tile, head_dim = q_ref.shape
    kv_tile = k_ref.shape[2]
    q = q_ref[...].reshape(2 * hb, q_tile, head_dim)
    k = k_ref[...].reshape(2 * hb, kv_tile, head_dim)
    s = jnp.einsum("bqd,bkd->bqk", q, k,
                   preferred_element_type=jnp.float32) * scaling
    s = _nan_to_num(s)
    m = m_ref[...].reshape(2 * hb, q_tile, 1)
    inv_l = pl.reciprocal(l_ref[...].reshape(2 * hb, q_tile, 1), approx=True)
    p = (jnp.exp(s - m) * inv_l).reshape(hb, 2, q_tile, kv_tile)
    aw_ref[...] = (p[:, 0] - lam_ref[0] * p[:, 1]).astype(aw_ref.dtype)


def diff_attn_core(q, k, v, lambda_full, subln_w, scaling, lambda_init, *,
                   eps=1e-5, need_weights=True, q_block=128, kv_block=256):
    """q/k: (B, H, 2, T|S, Hd), v: (B, H, S, Hd). Returns (attn, attn_weights)."""
    B, H, _, T, Hd = q.shape
    S = k.shape[3]

    hb = _tile(H, max(1, 128 // max(Hd, 1)))   # heads per block (MXU fill)
    Tt = _tile(T, q_block)
    St = _tile(S, kv_block)
    grid = (B, H // hb, T // Tt, S // St)

    lam = jnp.asarray(lambda_full, jnp.float32).reshape(1)
    gw = subln_w.astype(jnp.float32).reshape(1, Hd)

    qk_bytes = (q.size + k.size) * q.dtype.itemsize
    flash_cost = pl.CostEstimate(
        flops=int(8 * B * H * T * S * Hd),
        transcendentals=int(2 * B * H * T * S),
        bytes_accessed=int(qk_bytes + v.size * v.dtype.itemsize
                           + B * H * T * Hd * 4 + 4 * B * H * T * 4))

    flash = functools.partial(_diff_flash_kernel, scaling=scaling,
                              lambda_init=lambda_init, eps=eps)
    out, m_stat, l_stat = pl.pallas_call(
        flash,
        out_shape=(jax.ShapeDtypeStruct((B, H, T, Hd), jnp.float32),
                   jax.ShapeDtypeStruct((B, H, 2, T, 1), jnp.float32),
                   jax.ShapeDtypeStruct((B, H, 2, T, 1), jnp.float32)),
        grid=grid,
        in_specs=[
            pl.BlockSpec(memory_space=pltpu.MemorySpace.SMEM),        # lambda
            pl.BlockSpec((1, Hd), lambda b, h, qi, ki: (0, 0)),       # RMSNorm w
            pl.BlockSpec((None, hb, 2, Tt, Hd),
                         lambda b, h, qi, ki: (b, h, 0, qi, 0)),
            pl.BlockSpec((None, hb, 2, St, Hd),
                         lambda b, h, qi, ki: (b, h, 0, ki, 0)),
            pl.BlockSpec((None, hb, St, Hd),
                         lambda b, h, qi, ki: (b, h, ki, 0)),
        ],
        out_specs=(
            pl.BlockSpec((None, hb, Tt, Hd), lambda b, h, qi, ki: (b, h, qi, 0)),
            pl.BlockSpec((None, hb, 2, Tt, 1),
                         lambda b, h, qi, ki: (b, h, 0, qi, 0)),
            pl.BlockSpec((None, hb, 2, Tt, 1),
                         lambda b, h, qi, ki: (b, h, 0, qi, 0)),
        ),
        scratch_shapes=[
            pltpu.VMEM((2 * hb, Tt, 1), jnp.float32),    # running max
            pltpu.VMEM((2 * hb, Tt, 1), jnp.float32),    # running sum
            pltpu.VMEM((2 * hb, Tt, Hd), jnp.float32),   # running numerator
        ],
        compiler_params=pltpu.CompilerParams(
            dimension_semantics=("parallel", "parallel", "parallel", "arbitrary"),
            vmem_limit_bytes=32 * 1024 * 1024),
        cost_estimate=flash_cost,
    )(lam, gw, q, k, v)

    if not need_weights:
        return out, None

    w_cost = pl.CostEstimate(
        flops=int(4 * B * H * T * S * Hd + 4 * B * H * T * S),
        transcendentals=int(2 * B * H * T * S),
        bytes_accessed=int(qk_bytes + B * H * T * S * 4))
    weights = functools.partial(_diff_weights_kernel, scaling=scaling)
    aw = pl.pallas_call(
        weights,
        out_shape=jax.ShapeDtypeStruct((B, H, T, S), jnp.float32),
        grid=grid,
        in_specs=[
            pl.BlockSpec(memory_space=pltpu.MemorySpace.SMEM),
            pl.BlockSpec((None, hb, 2, Tt, Hd),
                         lambda b, h, qi, ki: (b, h, 0, qi, 0)),
            pl.BlockSpec((None, hb, 2, St, Hd),
                         lambda b, h, qi, ki: (b, h, 0, ki, 0)),
            pl.BlockSpec((None, hb, 2, Tt, 1),
                         lambda b, h, qi, ki: (b, h, 0, qi, 0)),
            pl.BlockSpec((None, hb, 2, Tt, 1),
                         lambda b, h, qi, ki: (b, h, 0, qi, 0)),
        ],
        out_specs=pl.BlockSpec((None, hb, Tt, St),
                               lambda b, h, qi, ki: (b, h, qi, ki)),
        compiler_params=pltpu.CompilerParams(
            dimension_semantics=("parallel", "parallel", "parallel", "arbitrary"),
            vmem_limit_bytes=32 * 1024 * 1024),
        cost_estimate=w_cost,
    )(lam, q, k, m_stat, l_stat)
    return out, aw


# ---------------------------------------------------------------------------
# Full forward (glue reshapes in plain JAX, hot paths in Pallas)
# ---------------------------------------------------------------------------
def diff_mha_forward(query, key, value, params, num_heads, lambda_init, *,
                     need_weights=True):
    tgt_len, bsz, embed_dim = query.shape
    src_len = key.shape[0]
    head_dim = embed_dim // num_heads
    scaling = head_dim ** (-0.5)

    # --- Projections (torch Linear: y = x @ W.T, no bias). -----------------
    # Self-attention: one fused GEMM over concatenated [w_q; w_k; w_v].
    if (query is key) and (key is value):
        x2d = query.reshape(tgt_len * bsz, embed_dim)
        w_qkv = jnp.concatenate(
            [params["w_q"], params["w_k"], params["w_v"]], axis=0)   # (5E, E)
        qkv = pallas_linear(x2d, w_qkv, out_dtype=jnp.bfloat16)
        q2d = qkv[:, : 2 * embed_dim]
        k2d = qkv[:, 2 * embed_dim: 4 * embed_dim]
        v2d = qkv[:, 4 * embed_dim:]
    else:
        q2d = pallas_linear(query.reshape(-1, embed_dim), params["w_q"],
                            out_dtype=jnp.bfloat16)
        k2d = pallas_linear(key.reshape(-1, embed_dim), params["w_k"],
                            out_dtype=jnp.bfloat16)
        v2d = pallas_linear(value.reshape(-1, embed_dim), params["w_v"],
                            out_dtype=jnp.bfloat16)

    # Reproduce torch's raw .view() reinterpretations (flat reshapes) and split
    # the interleaved 2*num_heads axis into (num_heads, 2) components.
    q = (q2d.reshape(bsz, tgt_len, 2 * num_heads, head_dim)
         .transpose(0, 2, 1, 3)
         .reshape(bsz, num_heads, 2, tgt_len, head_dim))
    k = (k2d.reshape(bsz, src_len, 2 * num_heads, head_dim)
         .transpose(0, 2, 1, 3)
         .reshape(bsz, num_heads, 2, src_len, head_dim))
    v = (v2d.reshape(bsz, src_len, num_heads, head_dim)
         .transpose(0, 2, 1, 3))

    lambda_1 = jnp.exp(jnp.sum(params["lambda_q1"] * params["lambda_k1"]))
    lambda_2 = jnp.exp(jnp.sum(params["lambda_q2"] * params["lambda_k2"]))
    lambda_full = lambda_1 - lambda_2 + lambda_init

    attn, attn_weights = diff_attn_core(
        q, k, v, lambda_full, params["subln_w"], scaling, lambda_init,
        need_weights=need_weights)

    # torch: attn.view(tgt_len, bsz, embed_dim) on a contiguous (B,H,T,Hd) tensor.
    attn = attn.reshape(tgt_len * bsz, embed_dim)
    out = pallas_linear(attn, params["w_o"], out_dtype=jnp.float32)
    return out.reshape(tgt_len, bsz, embed_dim), attn_weights


# ---------------------------------------------------------------------------
# Pure-JAX (f32) reference for validation
# ---------------------------------------------------------------------------
def reference_forward(query, key, value, params, num_heads, lambda_init):
    tgt_len, bsz, embed_dim = query.shape
    src_len = key.shape[0]
    head_dim = embed_dim // num_heads
    scaling = head_dim ** (-0.5)

    q = query.reshape(-1, embed_dim) @ params["w_q"].T
    k = key.reshape(-1, embed_dim) @ params["w_k"].T
    v = value.reshape(-1, embed_dim) @ params["w_v"].T
    q = q.reshape(bsz, tgt_len, 2 * num_heads, head_dim).transpose(0, 2, 1, 3) * scaling
    k = k.reshape(bsz, src_len, 2 * num_heads, head_dim).transpose(0, 2, 1, 3)
    v = v.reshape(bsz, src_len, num_heads, head_dim).transpose(0, 2, 1, 3)

    aw = jnp.nan_to_num(jnp.einsum("bhtd,bhsd->bhts", q, k))
    aw = jax.nn.softmax(aw, axis=-1)
    lam1 = jnp.exp(jnp.sum(params["lambda_q1"] * params["lambda_k1"]))
    lam2 = jnp.exp(jnp.sum(params["lambda_q2"] * params["lambda_k2"]))
    lam = lam1 - lam2 + lambda_init
    aw = aw.reshape(bsz, num_heads, 2, tgt_len, src_len)
    aw = aw[:, :, 0] - lam * aw[:, :, 1]
    attn = jnp.einsum("bhts,bhsd->bhtd", aw, v)
    ms = jnp.mean(attn * attn, axis=-1, keepdims=True)
    attn = attn * lax.rsqrt(ms + 1e-5) * params["subln_w"]
    attn = attn * (1.0 - lambda_init)
    attn = attn.reshape(tgt_len, bsz, embed_dim)
    out = (attn.reshape(-1, embed_dim) @ params["w_o"].T).reshape(
        tgt_len, bsz, embed_dim)
    return out, aw


# ---------------------------------------------------------------------------
def _xavier_uniform(key, shape):
    fan_out, fan_in = shape
    bound = math.sqrt(6.0 / (fan_in + fan_out))
    return jax.random.uniform(key, shape, jnp.float32, -bound, bound)


if __name__ == "__main__":
    embed_dim = 32
    num_heads = 4
    head_dim = embed_dim // num_heads
    seq = 8
    bsz = 2
    depth = 2
    lambda_init = lambda_init_fn(depth)

    root = jax.random.PRNGKey(0)
    keys = jax.random.split(root, 10)

    params = {
        "w_q": _xavier_uniform(keys[0], (2 * embed_dim, embed_dim)),
        "w_k": _xavier_uniform(keys[1], (2 * embed_dim, embed_dim)),
        "w_v": _xavier_uniform(keys[2], (embed_dim, embed_dim)),
        "w_o": _xavier_uniform(keys[3], (embed_dim, embed_dim)),
        "lambda_q1": 0.1 * jax.random.normal(keys[4], (head_dim,), jnp.float32),
        "lambda_k1": 0.1 * jax.random.normal(keys[5], (head_dim,), jnp.float32),
        "lambda_q2": 0.1 * jax.random.normal(keys[6], (head_dim,), jnp.float32),
        "lambda_k2": 0.1 * jax.random.normal(keys[7], (head_dim,), jnp.float32),
        "subln_w": jnp.ones((head_dim,), jnp.float32),
    }

    # Self-attention: query is key is value, shape (seq, batch, embed_dim).
    x = jax.random.normal(keys[8], (seq, bsz, embed_dim), jnp.float32)

    out, attn_w = diff_mha_forward(x, x, x, params, num_heads, lambda_init)
    out = jax.block_until_ready(out)
    attn_w = jax.block_until_ready(attn_w)

    ref_out, ref_aw = reference_forward(x, x, x, params, num_heads, lambda_init)

    assert out.shape == (seq, bsz, embed_dim)
    assert attn_w.shape == (bsz, num_heads, seq, seq)
    # q/k/v run through the attention core in bf16 (f32 accumulation, approx
    # reciprocal), so the comparison against the pure-f32 reference uses a
    # bf16-appropriate tolerance.
    assert jnp.allclose(attn_w, ref_aw, atol=2e-2, rtol=2e-2), (
        float(jnp.max(jnp.abs(attn_w - ref_aw))))
    assert jnp.allclose(out, ref_out, atol=5e-2, rtol=5e-2), (
        float(jnp.max(jnp.abs(out - ref_out))))

    print("KERNEL_OK")
</pallas_src>

<mosaic_0001>
module attributes {stable_mosaic.version = 11 : i64} {
  func.func @_linear_kernel(%arg0: i32, %arg1: i32, %arg2: i32, %arg3: memref<16x32xf32, #tpu.memory_space<vmem>>, %arg4: memref<160x32xf32, #tpu.memory_space<vmem>>, %arg5: memref<16x160xbf16, #tpu.memory_space<vmem>>, %arg6: memref<16x160xf32, #tpu.memory_space<vmem>>) attributes {dimension_semantics = [#tpu.dimension_semantics<parallel>, #tpu.dimension_semantics<parallel>, #tpu.dimension_semantics<arbitrary>], iteration_bounds = array<i64: 1, 1, 1>, scalar_prefetch = 0 : i64, scratch_operands = 1 : i64, tpu.core_type = #tpu.core_type<tc>, window_params = [{transform_indices = @transform_0, window_bounds = array<i64: 16, 32>}, {transform_indices = @transform_1, window_bounds = array<i64: 160, 32>}, {transform_indices = @transform_2, window_bounds = array<i64: 16, 160>}]} {
    %c0_i32 = arith.constant 0 : i32
    %0 = arith.cmpi eq, %arg2, %c0_i32 : i32
    %1 = arith.extui %0 : i1 to i32
    %c0_i32_0 = arith.constant 0 : i32
    %2 = arith.cmpi ne, %1, %c0_i32_0 : i32
    scf.if %2 {
      %cst_10 = arith.constant 0.000000e+00 : f32
      %12 = vector.broadcast %cst_10 : f32 to vector<16x160xf32>
      %c0_11 = arith.constant 0 : index
      %c0_12 = arith.constant 0 : index
      %13 = vector.load %arg6[%c0_11, %c0_12] : memref<16x160xf32, #tpu.memory_space<vmem>>, vector<16x160xf32>
      tpu.vector_store %arg6[%c0_11, %c0_12], %12 {strides = array<i32>} : memref<16x160xf32, #tpu.memory_space<vmem>>, vector<16x160xf32>,
    } else {
    }
    %c0 = arith.constant 0 : index
    %c0_1 = arith.constant 0 : index
    %3 = vector.load %arg6[%c0, %c0_1] : memref<16x160xf32, #tpu.memory_space<vmem>>, vector<16x160xf32>
    %c0_2 = arith.constant 0 : index
    %c0_3 = arith.constant 0 : index
    %4 = vector.load %arg3[%c0_2, %c0_3] : memref<16x32xf32, #tpu.memory_space<vmem>>, vector<16x32xf32>
    %c0_4 = arith.constant 0 : index
    %c0_5 = arith.constant 0 : index
    %5 = vector.load %arg4[%c0_4, %c0_5] : memref<160x32xf32, #tpu.memory_space<vmem>>, vector<160x32xf32>
    %cst = arith.constant dense<0.000000e+00> : vector<16x160xf32>
    %6 = tpu.matmul %4, %5, %cst {dimension_numbers = #tpu.dot_dimension_numbers<[1], [1], [0], [0], [0, 0, 1, 0], [], []>} : vector<16x32xf32>, vector<160x32xf32>, vector<16x160xf32> -> vector<16x160xf32>
    %7 = arith.addf %3, %6 : vector<16x160xf32>
    %c0_6 = arith.constant 0 : index
    %c0_7 = arith.constant 0 : index
    %8 = vector.load %arg6[%c0_6, %c0_7] : memref<16x160xf32, #tpu.memory_space<vmem>>, vector<16x160xf32>
    tpu.vector_store %arg6[%c0_6, %c0_7], %7 {strides = array<i32>} : memref<16x160xf32, #tpu.memory_space<vmem>>, vector<16x160xf32>,
    %c0_i32_8 = arith.constant 0 : i32
    %9 = arith.cmpi eq, %arg2, %c0_i32_8 : i32
    %10 = arith.extui %9 : i1 to i32
    %c0_i32_9 = arith.constant 0 : i32
    %11 = arith.cmpi ne, %10, %c0_i32_9 : i32
    scf.if %11 {
      %c0_10 = arith.constant 0 : index
      %c0_11 = arith.constant 0 : index
      %12 = vector.load %arg6[%c0_10, %c0_11] : memref<16x160xf32, #tpu.memory_space<vmem>>, vector<16x160xf32>
      %13 = arith.truncf %12 : vector<16x160xf32> to vector<16x160xbf16>
      %c0_12 = arith.constant 0 : index
      %c0_13 = arith.constant 0 : index
      %14 = vector.load %arg5[%c0_12, %c0_13] : memref<16x160xbf16, #tpu.memory_space<vmem>>, vector<16x160xbf16>
      tpu.vector_store %arg5[%c0_12, %c0_13], %13 {strides = array<i32>} : memref<16x160xbf16, #tpu.memory_space<vmem>>, vector<16x160xbf16>,
    } else {
    }
    return
  }
  func.func @transform_0(%arg0: i32, %arg1: i32, %arg2: i32) -> (i32, i32) {
    %c0_i32 = arith.constant 0 : i32
    return %arg0, %arg2 : i32, i32
  }
  func.func @transform_1(%arg0: i32, %arg1: i32, %arg2: i32) -> (i32, i32) {
    %c0_i32 = arith.constant 0 : i32
    return %arg1, %arg2 : i32, i32
  }
  func.func @transform_2(%arg0: i32, %arg1: i32, %arg2: i32) -> (i32, i32) {
    %c0_i32 = arith.constant 0 : i32
    return %arg0, %arg1 : i32, i32
  }
}

</mosaic_0001>

<llo_original>
// kernel: tpu_custom_call.1
$region0: #{tpu_custom_call.1}
  #allocation0 [shape = 'u32[]', space=smem, size = 0x4, offset = 0x4, fixed_abs, tag = 'smem constant byte address 0x4 - core index']
  #allocation1 [shape = 'u32[144,128]{1,0:T(1,128)}', space=vmem, size = 0x12000, scoped, tag = 'internal scratch']
  #allocation2 [shape = 'f32[16,160]{1,0:T(8,128)}', space=vmem, size = 0x4000, scoped, tag = 'scratch operand']
  %s0 = inlined_call_operand.vmem [shape: f32[16,32], index: 0, kind: input, shape index: {}]
  %s1 = inlined_call_operand.vmem [shape: f32[160,32], index: 1, kind: input, shape index: {}]
  %s2 = inlined_call_operand.hbm [shape: bf16[16,160], index: 2, kind: output, shape index: {}]
  %s3 = sld [smem:[#allocation0]]
  $region26: #{tpu_custom_call.1} parent=0
    _
  %s5 = ssub.s32 1, %s3
  %s6 = scalar_select 0, %s5, %s3
  $region1: #{tpu_custom_call.1} parent=0
    #allocation3 [shape = 'u8[8192]{0}', space=vmem, size = 0x2000, scoped, tag = 'output window, operand 0, single buffered']
    #allocation4 [shape = 's32[1]{0}', space=sflag, size = 0x4, scoped, tag = 'scoped memory for tpu_custom_call.1']
    %7 = vsyncpa [#allocation4], 0
    // Predicated region
    $region2: #{tpu_custom_call.1} parent=1 // pred_check
      _
    $region3: #{tpu_custom_call.1} parent=1 // pred_check_branch
      %9 = sbr.rel (0) target = $region5
    $region4: #{tpu_custom_call.1} parent=1 // pred_region
      _
    $region5: #{tpu_custom_call.1} parent=1 // pred_fallthru
      _
    // Predicated region
    $region6: #{tpu_custom_call.1} parent=1 // pred_check
      _
    $region7: #{tpu_custom_call.1} parent=1 // pred_check_branch
      %11 = sbr.rel (0) target = $region9
    $region8: #{tpu_custom_call.1} parent=1 // pred_region
      _
    $region9: #{tpu_custom_call.1} parent=1 // pred_fallthru
      _
    %p12 = scmp.eq.s32.totalorder 0, 0
    // Predicated region
    $region10: #{tpu_custom_call.1} parent=1 // pred_check
      %p13 = pneg %p12
    $region11: #{tpu_custom_call.1} parent=1 // pred_check_branch
      %15 = sbr.rel (%p13) target = $region13
    $region12: #{tpu_custom_call.1} parent=1 // pred_region
      %16 = vst [vmem:[#allocation2] sm:$0xff] 0.0
      %vm17 = vcmask 261120
      %18 = vst.msk [vmem:[#allocation2 + $0x8] sm:$0xff] %vm17, 0.0
      %19 = vst [vmem:[#allocation2 + $0x10] sm:$0xff] 0.0
      %20 = vst.msk [vmem:[#allocation2 + $0x18] sm:$0xff] %vm17, 0.0
    $region13: #{tpu_custom_call.1} parent=1 // pred_fallthru
      _
    %v21 = vld [vmem:[#allocation2] sm:$0xff]
    %v22 = vld [vmem:[#allocation2 + $0x8] sm:$0xff]
    %v23 = vld [vmem:[#allocation2 + $0x10] sm:$0xff]
    %v24 = vld [vmem:[#allocation2 + $0x18] sm:$0xff]
    %v25 = vld [vmem:[%s0] sm:$0xff]
    %v26 = vld [vmem:[%s0 + $0x8] sm:$0xff]
    %v27 = vld [vmem:[%s1] sm:$0xff]
    %v28 = vld [vmem:[%s1 + $0x8] sm:$0xff]
    %v29 = vld [vmem:[%s1 + $0x10] sm:$0xff]
    %v30 = vld [vmem:[%s1 + $0x18] sm:$0xff]
    %v31 = vld [vmem:[%s1 + $0x20] sm:$0xff]
    %v32 = vld [vmem:[%s1 + $0x28] sm:$0xff]
    %v33 = vld [vmem:[%s1 + $0x30] sm:$0xff]
    %v34 = vld [vmem:[%s1 + $0x38] sm:$0xff]
    %v35 = vld [vmem:[%s1 + $0x40] sm:$0xff]
    %v36 = vld [vmem:[%s1 + $0x48] sm:$0xff]
    %v37 = vld [vmem:[%s1 + $0x50] sm:$0xff]
    %v38 = vld [vmem:[%s1 + $0x58] sm:$0xff]
    %v39 = vld [vmem:[%s1 + $0x60] sm:$0xff]
    %v40 = vld [vmem:[%s1 + $0x68] sm:$0xff]
    %v41 = vld [vmem:[%s1 + $0x70] sm:$0xff]
    %v42 = vld [vmem:[%s1 + $0x78] sm:$0xff]
    %v43 = vld [vmem:[%s1 + $0x80] sm:$0xff]
    %v44 = vld [vmem:[%s1 + $0x88] sm:$0xff]
    %v45 = vld [vmem:[%s1 + $0x90] sm:$0xff]
    %v46 = vld [vmem:[%s1 + $0x98] sm:$0xff]
    %vm47 = vcmask 261120
    %v49 = vsel %vm47, %v25, 0
    %v52 = vsel %vm47, %v26, 0
    %v55 = vsel %vm47, %v27, 0
    %v58 = vsel %vm47, %v28, 0
    %v61 = vsel %vm47, %v29, 0
    %v64 = vsel %vm47, %v30, 0
    %v67 = vsel %vm47, %v31, 0
    %v70 = vsel %vm47, %v32, 0
    %v73 = vsel %vm47, %v33, 0
    %v76 = vsel %vm47, %v34, 0
    %v79 = vsel %vm47, %v35, 0
    %v82 = vsel %vm47, %v36, 0
    %v85 = vsel %vm47, %v37, 0
    %v88 = vsel %vm47, %v38, 0
    %v91 = vsel %vm47, %v39, 0
    %v94 = vsel %vm47, %v40, 0
    %v97 = vsel %vm47, %v41, 0
    %v100 = vsel %vm47, %v42, 0
    %v103 = vsel %vm47, %v43, 0
    %v106 = vsel %vm47, %v44, 0
    %v109 = vsel %vm47, %v45, 0
    %v112 = vsel %vm47, %v46, 0
    %114 = vmatprep.subr.mxu0 0.0
    %115 = vmatpush1.xpose.msra.mxu0 %v100
    %116 = vmatprep.subr.mxu0 0.0
    %117 = vmatpush1.xpose.msra.mxu0 %v97
    %118 = vmatprep.subr.mxu0 0.0
    %119 = vmatpush1.xpose.msra.mxu0 %v94
    %120 = vmatprep.subr.mxu0 0.0
    %121 = vmatpush1.xpose.msra.mxu0 %v91
    %122 = vmatprep.subr.mxu0 0.0
    %123 = vmatpush1.xpose.msra.mxu0 %v88
    %124 = vmatprep.subr.mxu0 0.0
    %125 = vmatpush1.xpose.msra.mxu0 %v85
    %126 = vmatprep.subr.mxu0 0.0
    %127 = vmatpush1.xpose.msra.mxu0 %v82
    %128 = vmatprep.subr.mxu0 0.0
    %129 = vmatpush1.xpose.msra.mxu0 %v79
    %130 = vmatprep.subr.mxu0 0.0
    %131 = vmatpush1.xpose.msra.mxu0 %v76
    %132 = vmatprep.subr.mxu0 0.0
    %133 = vmatpush1.xpose.msra.mxu0 %v73
    %134 = vmatprep.subr.mxu0 0.0
    %135 = vmatpush1.xpose.msra.mxu0 %v70
    %136 = vmatprep.subr.mxu0 0.0
    %137 = vmatpush1.xpose.msra.mxu0 %v67
    %138 = vmatprep.subr.mxu0 0.0
    %139 = vmatpush1.xpose.msra.mxu0 %v64
    %140 = vmatprep.subr.mxu0 0.0
    %141 = vmatpush1.xpose.msra.mxu0 %v61
    %142 = vmatprep.subr.mxu0 0.0
    %143 = vmatpush1.xpose.msra.mxu0 %v58
    %144 = vmatprep.subr.mxu0 0.0
    %145 = vmatpush1.xpose.msra.mxu0 %v55
    %146 = vmatprep.subr.mxu0 0.0
    %147 = vmatpush2.xpose.msra.mxu0 0.0
    %148 = vmatprep.subr.mxu0 0.0
    %149 = vmatpush2.xpose.msra.mxu0 0.0
    %150 = vmatprep.subr.mxu0 0.0
    %151 = vmatpush2.xpose.msra.mxu0 0.0
    %152 = vmatprep.subr.mxu0 0.0
    %153 = vmatpush2.xpose.msra.mxu0 0.0
    %154 = vmatprep.subr.mxu0 0.0
    %155 = vmatpush2.xpose.msra.mxu0 0.0
    %156 = vmatprep.subr.mxu0 0.0
    %157 = vmatpush2.xpose.msra.mxu0 0.0
    %158 = vmatprep.subr.mxu0 0.0
    %159 = vmatpush2.xpose.msra.mxu0 0.0
    %160 = vmatprep.subr.mxu0 0.0
    %161 = vmatpush2.xpose.msra.mxu0 0.0
    %162 = vmatprep.subr.mxu0 0.0
    %163 = vmatpush2.xpose.msra.mxu0 0.0
    %164 = vmatprep.subr.mxu0 0.0
    %165 = vmatpush2.xpose.msra.mxu0 0.0
    %166 = vmatprep.subr.mxu0 0.0
    %167 = vmatpush2.xpose.msra.mxu0 0.0
    %168 = vmatprep.subr.mxu0 0.0
    %169 = vmatpush2.xpose.msra.mxu0 0.0
    %170 = vmatprep.subr.mxu0 0.0
    %171 = vmatpush2.xpose.msra.mxu0 %v112
    %172 = vmatprep.subr.mxu0 0.0
    %173 = vmatpush2.xpose.msra.mxu0 %v109
    %174 = vmatprep.subr.mxu0 0.0
    %175 = vmatpush2.xpose.msra.mxu0 %v106
    %176 = vmatprep.subr.mxu0 0.0
    %177 = vmatpush2.xpose.msra.mxu0 %v103
    %178 = vmatprep.mubr.f32.mxu0 0.0
    %179 = vmatmul.mubr.f32.gmra.mxu0 %v49
    %v180 = vpop.f32.mrf.mxu0
    %v181 = vadd.f32 0.0, %v180
    %v182 = vpop.f32.mrf.mxu0
    %v183 = vadd.f32 0.0, %v182
    %184 = vmatprep.mubr.f32.mxu0 0.0
    %185 = vmatmul.mubr.f32.gmra.mxu0 %v52
    %v186 = vpop.f32.mrf.mxu0
    %v187 = vadd.f32 0.0, %v186
    %v188 = vpop.f32.mrf.mxu0
    %v189 = vadd.f32 0.0, %v188
    %190 = vdwg.mxu0
    %v191 = vadd.f32 %v21, %v181
    %v192 = vadd.f32 %v22, %v183
    %v193 = vadd.f32 %v23, %v187
    %v194 = vadd.f32 %v24, %v189
    %195 = vst [vmem:[#allocation2] sm:$0xff] %v191
    %196 = vst.msk [vmem:[#allocation2 + $0x8] sm:$0xff] %vm47, %v192
    %197 = vst [vmem:[#allocation2 + $0x10] sm:$0xff] %v193
    %198 = vst.msk [vmem:[#allocation2 + $0x18] sm:$0xff] %vm47, %v194
    // Predicated region
    $region14: #{tpu_custom_call.1} parent=1 // pred_check
      %p199 = pneg %p12
    $region15: #{tpu_custom_call.1} parent=1 // pred_check_branch
      %201 = sbr.rel (%p199) target = $region17
    $region16: #{tpu_custom_call.1} parent=1 // pred_region
      %v202 = vld [vmem:[#allocation2] sm:$0xff]
      %v203 = vld [vmem:[#allocation2 + $0x8] sm:$0xff]
      %v204 = vld [vmem:[#allocation2 + $0x10] sm:$0xff]
      %v205 = vld [vmem:[#allocation2 + $0x18] sm:$0xff]
      %v206 = vpack.c.bf16 %v204, %v202
      %v207 = vpack.c.bf16 %v205, %v203
      %v210 = vunpack.c.l.b16 %v206
      %v211 = vunpack.c.l.b16 %v207
      %v212 = vunpack.c.h.b16 %v206
      %v213 = vunpack.c.h.b16 %v207
      %v214 = vpack.c.b16 %v211, %v210
      %v215 = vpack.c.b16 %v213, %v212
      %vm218 = vcmask 1043456
      %vm219 = vcmask 261124
      %vm220 = vmor %vm219, %vm218
      %221 = vst.msk [vmem:[#allocation3] sm:$0xff] %vm220, %v214
      %222 = vst.msk [vmem:[#allocation3 + $0x8] sm:$0xff] %vm220, %v215
    $region17: #{tpu_custom_call.1} parent=1 // pred_fallthru
      _
    // Predicated region
    $region18: #{tpu_custom_call.1} parent=1 // pred_check
      _
    $region19: #{tpu_custom_call.1} parent=1 // pred_check_branch
      %224 = sbr.rel (0) target = $region21
    $region20: #{tpu_custom_call.1} parent=1 // pred_region
      %s226 = ssub.s32 256, 256
      %227 = vsyncadd [#allocation4], %s226
      %s228 = sshll.u32 [#allocation3], 4
      %s229 = int_to_ptr.vmem [resolvable:$true] %s228
      %234 = dma.vmem_to_hbm [thread:$0]  %s229, 256, %s2, [#allocation4], 128, 128, 8
    $region21: #{tpu_custom_call.1} parent=1 // pred_fallthru
      _
    // Predicated region
    $region22: #{tpu_custom_call.1} parent=1 // pred_check
      _
    $region23: #{tpu_custom_call.1} parent=1 // pred_check_branch
      %236 = sbr.rel (0) target = $region25
    $region24: #{tpu_custom_call.1} parent=1 // pred_region
      %237 = dma.done [#allocation4], 256
    $region25: #{tpu_custom_call.1} parent=1 // pred_fallthru
      _
    %238 = vsyncpa [#allocation4], 1

</llo_original>
